<compile_context>
chip_gen: v7x
topology: tpu7x:2x2x1
jax: 0.10.0
libtpu: 0.0.40
codegen_flags: <defaults>
</compile_context>

<pallas_src>
import functools
import math

import jax
import jax.numpy as jnp
import numpy as np
from jax.experimental import pallas as pl
from jax.experimental.pallas import tpu as pltpu


def _oneof_kernel(tid_ref, bank_ref, x_ref, o_ref, *, shifts, bias_col):
    # tid_ref : SMEM scalar prefetch; the selection was already consumed by
    #           the bank index_map, nothing left to do with it here.
    # bank_ref: (R, R+1) selected coefficient bank, resident in VMEM.
    #             column d (< R): per-row coefficient for sublane shift d
    #             column R      : per-row bias
    # x_ref   : (R, T) sublane-dense input block (R = NB*C rows, T lanes)
    # o_ref   : (R, T)
    del tid_ref
    x = x_ref[...]
    # y[r, :] = bias[r] + sum_d coeff[r, d] * x[(r - d) % R, :]
    # (pure VPU MAC + XLU sublane rotates; no jnp.dot / MXU)
    acc = bank_ref[:, bias_col:bias_col + 1] + bank_ref[:, 0:1] * x
    for d in shifts:  # static unroll over shifts whose column is not all-zero
        acc = acc + bank_ref[:, d:d + 1] * pltpu.roll(x, shift=d, axis=0)
    o_ref[...] = acc.astype(o_ref.dtype)


def _rows_per_block(B, C):
    """Images per block so rows = NB*C is a multiple of 8 (full sublanes)."""
    nb = 8 // math.gcd(C, 8)  # smallest NB with NB*C % 8 == 0
    if B % nb == 0:
        return nb
    # TODO(synk): batches that cannot pack to an 8-row multiple fall back to a
    # single full-extent row block (rare; not exercised by the demo shapes).
    return B


def _spatial_chunk(HW, cap):
    cap = max(128, (cap // 128) * 128)
    if HW <= cap or HW % 128 != 0:
        return HW  # single full-extent chunk — no pad, no output slice
    t = cap
    while HW % t:  # largest multiple of 128 that divides HW and is <= cap
        t -= 128
    return t


def _build_bank(weights, biases, nb):
    """Coefficient bank for the roll-based channel mix.

    bank[k, r, d] (d < R): weight applied to roll(x, d)[r] == x[(r - d) % R]
    bank[k, r, R]        : bias for output row r
    Rows are r = image*C + channel, and coefficients are zeroed whenever the
    rotated source row would belong to a different image, so the mix stays
    strictly inside each image of the packed block.
    """
    K, C, _ = weights.shape
    R = nb * C
    r = np.arange(R)
    o = r % C                                   # output channel of row r
    d = np.arange(R)                            # sublane shift
    m = (o[:, None] - d[None, :]) % R           # candidate source channel
    valid = m < C                               # stays inside the same image
    coeff = weights[:, o[:, None], np.where(valid, m, 0)]        # (K, R, R)
    coeff = jnp.where(jnp.asarray(valid)[None], coeff, 0.0)
    bias_col = biases[:, o][..., None]                           # (K, R, 1)
    bank = jnp.concatenate(
        [coeff.astype(jnp.float32), bias_col.astype(jnp.float32)], axis=-1)
    shifts = tuple(int(s) for s in d[valid.any(axis=0)] if s != 0)
    return bank, shifts


def one_of_apply(x_nchw, weights, biases, t_idx, *, t_hw_cap=32768):
    """Apply transforms[t_idx] (a 1x1 conv) to x; selection via scalar prefetch.

    x_nchw : [B, C, H, W] float32
    weights: [K, C, C]    float32   (per-transform W[c_out, c_in])
    biases : [K, C]       float32
    t_idx  : int32 array of shape (1,)
    """
    B, C, H, W = x_nchw.shape
    K = weights.shape[0]
    HW = H * W

    nb = _rows_per_block(B, C)
    R = nb * C
    t_hw = _spatial_chunk(HW, t_hw_cap)

    # Free reshape of contiguous NCHW — no transpose, no pad, no slice.
    x2 = x_nchw.reshape(B * C, HW)
    bank, shifts = _build_bank(weights, biases, nb)

    # Guard the selection index (matches torch.randint range semantics; clamp
    # instead of erroring on an out-of-range index).
    tid = jnp.clip(t_idx.astype(jnp.int32), 0, K - 1)

    grid = (B // nb, HW // t_hw)
    kernel = functools.partial(_oneof_kernel, shifts=shifts, bias_col=R)

    grid_spec = pltpu.PrefetchScalarGridSpec(
        num_scalar_prefetch=1,
        grid=grid,
        in_specs=[
            # Selected coefficient bank: block index along K comes from the
            # prefetched t_idx; constant across the grid -> stays resident.
            pl.BlockSpec((pl.Squeezed(), R, R + 1),
                         lambda b, s, tid: (tid[0], 0, 0)),
            # Sublane-dense input block: NB images x C channels x t_hw lanes.
            pl.BlockSpec((R, t_hw), lambda b, s, tid: (b, s)),
        ],
        out_specs=pl.BlockSpec((R, t_hw), lambda b, s, tid: (b, s)),
    )

    y = pl.pallas_call(
        kernel,
        out_shape=jax.ShapeDtypeStruct((B * C, HW), jnp.float32),
        grid_spec=grid_spec,
        compiler_params=pltpu.CompilerParams(
            dimension_semantics=("parallel", "parallel")),
    )(tid, bank, x2)

    return y.reshape(B, C, H, W)


if __name__ == "__main__":
    key = jax.random.PRNGKey(0)
    k_x, k_w, k_b, k_idx = jax.random.split(key, 4)

    # Small shapes consistent with an image-transform module.
    B, C, H, W = 2, 4, 16, 16
    K = 3  # number of transforms in the bank

    x = jax.random.normal(k_x, (B, C, H, W), dtype=jnp.float32)
    weights = jax.random.normal(k_w, (K, C, C), dtype=jnp.float32) * 0.1
    biases = jax.random.normal(k_b, (K, C), dtype=jnp.float32) * 0.1

    # torch.randint(0, len(transforms), (1,)).item() equivalent.
    # TODO(synk): torch uses its global RNG; here the random draw comes from a
    # deterministic JAX key so the run is reproducible.
    t_idx = jax.random.randint(k_idx, (1,), 0, K, dtype=jnp.int32)

    y = jax.block_until_ready(one_of_apply(x, weights, biases, t_idx))

    # Reference: selected 1x1 conv computed in numpy (exact f32 MAC).
    ti = int(t_idx[0])
    xn = np.asarray(x)
    wn = np.asarray(weights)[ti]
    bn = np.asarray(biases)[ti]
    ref = np.einsum("oc,bchw->bohw", wn, xn) + bn[None, :, None, None]
    assert np.allclose(np.asarray(y), ref, atol=1e-5, rtol=1e-5)

    print("KERNEL_OK")
</pallas_src>

<mosaic_0001>
module attributes {stable_mosaic.version = 11 : i64} {
  func.func @_oneof_kernel(%arg0: i32, %arg1: i32, %arg2: memref<1xi32, #tpu.memory_space<smem>>, %arg3: memref<1x8x9xf32, #tpu.memory_space<vmem>>, %arg4: memref<8x256xf32, #tpu.memory_space<vmem>>, %arg5: memref<8x256xf32, #tpu.memory_space<vmem>>) attributes {dimension_semantics = [#tpu.dimension_semantics<parallel>, #tpu.dimension_semantics<parallel>], iteration_bounds = array<i64: 1, 1>, scalar_prefetch = 1 : i64, scratch_operands = 0 : i64, tpu.core_type = #tpu.core_type<tc>, window_params = [{transform_indices = @transform_0, window_bounds = array<i64: 1, 8, 9>}, {transform_indices = @transform_1, window_bounds = array<i64: 8, 256>}, {transform_indices = @transform_2, window_bounds = array<i64: 8, 256>}]} {
    %c0 = arith.constant 0 : index
    %c0_0 = arith.constant 0 : index
    %0 = vector.load %arg4[%c0, %c0_0] : memref<8x256xf32, #tpu.memory_space<vmem>>, vector<8x256xf32>
    %c0_1 = arith.constant 0 : index
    %c0_2 = arith.constant 0 : index
    %c8 = arith.constant 8 : index
    %1 = vector.load %arg3[%c0_1, %c0_2, %c8] : memref<1x8x9xf32, #tpu.memory_space<vmem>>, vector<1x8x1xf32>
    %2 = vector.shape_cast %1 : vector<1x8x1xf32> to vector<8x1xf32>
    %c0_3 = arith.constant 0 : index
    %c0_4 = arith.constant 0 : index
    %c0_5 = arith.constant 0 : index
    %3 = vector.load %arg3[%c0_3, %c0_4, %c0_5] : memref<1x8x9xf32, #tpu.memory_space<vmem>>, vector<1x8x1xf32>
    %4 = vector.shape_cast %3 : vector<1x8x1xf32> to vector<8x1xf32>
    %5 = vector.broadcast %4 : vector<8x1xf32> to vector<8x256xf32>
    %6 = arith.mulf %5, %0 : vector<8x256xf32>
    %7 = vector.broadcast %2 : vector<8x1xf32> to vector<8x256xf32>
    %8 = arith.addf %7, %6 : vector<8x256xf32>
    %c0_6 = arith.constant 0 : index
    %c0_7 = arith.constant 0 : index
    %c1 = arith.constant 1 : index
    %9 = vector.load %arg3[%c0_6, %c0_7, %c1] : memref<1x8x9xf32, #tpu.memory_space<vmem>>, vector<1x8x1xf32>
    %10 = vector.shape_cast %9 : vector<1x8x1xf32> to vector<8x1xf32>
    %c1_i32 = arith.constant 1 : i32
    %11 = tpu.dynamic_rotate %0 by %c1_i32 dim 0 : vector<8x256xf32>, i32 -> vector<8x256xf32>
    %12 = vector.broadcast %10 : vector<8x1xf32> to vector<8x256xf32>
    %13 = arith.mulf %12, %11 : vector<8x256xf32>
    %14 = arith.addf %8, %13 : vector<8x256xf32>
    %c0_8 = arith.constant 0 : index
    %c0_9 = arith.constant 0 : index
    %c2 = arith.constant 2 : index
    %15 = vector.load %arg3[%c0_8, %c0_9, %c2] : memref<1x8x9xf32, #tpu.memory_space<vmem>>, vector<1x8x1xf32>
    %16 = vector.shape_cast %15 : vector<1x8x1xf32> to vector<8x1xf32>
    %c2_i32 = arith.constant 2 : i32
    %17 = tpu.dynamic_rotate %0 by %c2_i32 dim 0 : vector<8x256xf32>, i32 -> vector<8x256xf32>
    %18 = vector.broadcast %16 : vector<8x1xf32> to vector<8x256xf32>
    %19 = arith.mulf %18, %17 : vector<8x256xf32>
    %20 = arith.addf %14, %19 : vector<8x256xf32>
    %c0_10 = arith.constant 0 : index
    %c0_11 = arith.constant 0 : index
    %c3 = arith.constant 3 : index
    %21 = vector.load %arg3[%c0_10, %c0_11, %c3] : memref<1x8x9xf32, #tpu.memory_space<vmem>>, vector<1x8x1xf32>
    %22 = vector.shape_cast %21 : vector<1x8x1xf32> to vector<8x1xf32>
    %c3_i32 = arith.constant 3 : i32
    %23 = tpu.dynamic_rotate %0 by %c3_i32 dim 0 : vector<8x256xf32>, i32 -> vector<8x256xf32>
    %24 = vector.broadcast %22 : vector<8x1xf32> to vector<8x256xf32>
    %25 = arith.mulf %24, %23 : vector<8x256xf32>
    %26 = arith.addf %20, %25 : vector<8x256xf32>
    %c0_12 = arith.constant 0 : index
    %c0_13 = arith.constant 0 : index
    %c5 = arith.constant 5 : index
    %27 = vector.load %arg3[%c0_12, %c0_13, %c5] : memref<1x8x9xf32, #tpu.memory_space<vmem>>, vector<1x8x1xf32>
    %28 = vector.shape_cast %27 : vector<1x8x1xf32> to vector<8x1xf32>
    %c5_i32 = arith.constant 5 : i32
    %29 = tpu.dynamic_rotate %0 by %c5_i32 dim 0 : vector<8x256xf32>, i32 -> vector<8x256xf32>
    %30 = vector.broadcast %28 : vector<8x1xf32> to vector<8x256xf32>
    %31 = arith.mulf %30, %29 : vector<8x256xf32>
    %32 = arith.addf %26, %31 : vector<8x256xf32>
    %c0_14 = arith.constant 0 : index
    %c0_15 = arith.constant 0 : index
    %c6 = arith.constant 6 : index
    %33 = vector.load %arg3[%c0_14, %c0_15, %c6] : memref<1x8x9xf32, #tpu.memory_space<vmem>>, vector<1x8x1xf32>
    %34 = vector.shape_cast %33 : vector<1x8x1xf32> to vector<8x1xf32>
    %c6_i32 = arith.constant 6 : i32
    %35 = tpu.dynamic_rotate %0 by %c6_i32 dim 0 : vector<8x256xf32>, i32 -> vector<8x256xf32>
    %36 = vector.broadcast %34 : vector<8x1xf32> to vector<8x256xf32>
    %37 = arith.mulf %36, %35 : vector<8x256xf32>
    %38 = arith.addf %32, %37 : vector<8x256xf32>
    %c0_16 = arith.constant 0 : index
    %c0_17 = arith.constant 0 : index
    %c7 = arith.constant 7 : index
    %39 = vector.load %arg3[%c0_16, %c0_17, %c7] : memref<1x8x9xf32, #tpu.memory_space<vmem>>, vector<1x8x1xf32>
    %40 = vector.shape_cast %39 : vector<1x8x1xf32> to vector<8x1xf32>
    %c7_i32 = arith.constant 7 : i32
    %41 = tpu.dynamic_rotate %0 by %c7_i32 dim 0 : vector<8x256xf32>, i32 -> vector<8x256xf32>
    %42 = vector.broadcast %40 : vector<8x1xf32> to vector<8x256xf32>
    %43 = arith.mulf %42, %41 : vector<8x256xf32>
    %44 = arith.addf %38, %43 : vector<8x256xf32>
    %c0_18 = arith.constant 0 : index
    %c0_19 = arith.constant 0 : index
    %45 = vector.load %arg5[%c0_18, %c0_19] : memref<8x256xf32, #tpu.memory_space<vmem>>, vector<8x256xf32>
    tpu.vector_store %arg5[%c0_18, %c0_19], %44 {strides = array<i32>} : memref<8x256xf32, #tpu.memory_space<vmem>>, vector<8x256xf32>,
    return
  }
  func.func @transform_0(%arg0: i32, %arg1: i32, %arg2: memref<1xi32, #tpu.memory_space<smem>>) -> (i32, i32, i32) {
    %c0 = arith.constant 0 : index
    %0 = memref.load %arg2[%c0] : memref<1xi32, #tpu.memory_space<smem>>
    %c0_i32 = arith.constant 0 : i32
    %c0_i32_0 = arith.constant 0 : i32
    %c0_i32_1 = arith.constant 0 : i32
    return %0, %c0_i32, %c0_i32_0 : i32, i32, i32
  }
  func.func @transform_1(%arg0: i32, %arg1: i32, %arg2: memref<1xi32, #tpu.memory_space<smem>>) -> (i32, i32) {
    %c0_i32 = arith.constant 0 : i32
    return %arg0, %arg1 : i32, i32
  }
  func.func @transform_2(%arg0: i32, %arg1: i32, %arg2: memref<1xi32, #tpu.memory_space<smem>>) -> (i32, i32) {
    %c0_i32 = arith.constant 0 : i32
    return %arg0, %arg1 : i32, i32
  }
}

</mosaic_0001>

<llo_original>
// kernel: tpu_custom_call.1
$region0: #{tpu_custom_call.1}
  #allocation0 [shape = 'u32[]', space=smem, size = 0x4, offset = 0x4, fixed_abs, tag = 'smem constant byte address 0x4 - core index']
  #allocation1 [shape = 'u32[144,128]{1,0:T(1,128)}', space=vmem, size = 0x12000, scoped, tag = 'internal scratch']
  #allocation2 [shape = 's32[1]{0}', space=sflag, size = 0x4, scoped, tag = 'scoped memory for tpu_custom_call.1']
  #allocation3 [shape = 's32[1]{0:T(128)S(6)}', space=smem, size = 0x200, scoped, tag = 'prefetched SMEM operand 0']
  %s0 = inlined_call_operand.<no memory space> [shape: s32[1], index: 0, kind: input, shape index: {}]
  %s1 = inlined_call_operand.hbm [shape: f32[3,8,9], index: 1, kind: input, shape index: {}]
  %s2 = inlined_call_operand.hbm [shape: f32[8,256], index: 2, kind: input, shape index: {}]
  %s3 = inlined_call_operand.hbm [shape: f32[8,256], index: 3, kind: output, shape index: {}]
  %s4 = sld [smem:[#allocation0]]
  $region26: #{tpu_custom_call.1} parent=0
    _
  %s6 = ssub.s32 1, %s4
  %s7 = scalar_select 0, %s6, %s4
  %8 = sst [smem:[#allocation3]] %s0
  $region1: #{tpu_custom_call.1} parent=0
    #allocation4 [shape = 'u8[4096]{0}', space=vmem, size = 0x1000, scoped, tag = 'input window, operand 1, single buffered']
    #allocation5 [shape = 's32[1]{0}', space=sflag, size = 0x4, scoped, tag = 'scoped memory for tpu_custom_call.1']
    #allocation6 [shape = 's32[1]{0}', space=sflag, size = 0x4, scoped, tag = 'scoped memory for tpu_custom_call.1']
    #allocation7 [shape = 'u8[8192]{0}', space=vmem, size = 0x2000, scoped, tag = 'input window, operand 2, single buffered']
    #allocation8 [shape = 's32[1]{0}', space=sflag, size = 0x4, scoped, tag = 'scoped memory for tpu_custom_call.1']
    #allocation9 [shape = 'u8[8192]{0}', space=vmem, size = 0x2000, scoped, tag = 'output window, operand 0, single buffered']
    %9 = vsyncpa [#allocation5], 0
    %10 = vsyncpa [#allocation8], 0
    %11 = vsyncpa [#allocation6], 0
    // Predicated region
    $region2: #{tpu_custom_call.1} parent=1 // pred_check
      _
    $region3: #{tpu_custom_call.1} parent=1 // pred_check_branch
      %13 = sbr.rel (0) target = $region5
    $region4: #{tpu_custom_call.1} parent=1 // pred_region
      %s14 = sld [smem:[#allocation3]]
      %s16 = ssub.s32 128, 128
      %17 = vsyncadd [#allocation5], %s16
      %s18 = smul.addr %s14, 128
      %s19 = scalar_lea.hbm %s1, %s18
      %s21 = sshll.u32 [#allocation4], 4
      %s22 = int_to_ptr.vmem [resolvable:$true] %s21
      %24 = dma.hbm_to_vmem [thread:$0]  %s19, 128, %s22, [#allocation5]
    $region5: #{tpu_custom_call.1} parent=1 // pred_fallthru
      _
    // Predicated region
    $region6: #{tpu_custom_call.1} parent=1 // pred_check
      _
    $region7: #{tpu_custom_call.1} parent=1 // pred_check_branch
      %26 = sbr.rel (0) target = $region9
    $region8: #{tpu_custom_call.1} parent=1 // pred_region
      %s28 = ssub.s32 256, 256
      %29 = vsyncadd [#allocation8], %s28
      %s31 = sshll.u32 [#allocation7], 4
      %s32 = int_to_ptr.vmem [resolvable:$true] %s31
      %34 = dma.hbm_to_vmem [thread:$0]  %s2, 256, %s32, [#allocation8]
    $region9: #{tpu_custom_call.1} parent=1 // pred_fallthru
      _
    // Predicated region
    $region10: #{tpu_custom_call.1} parent=1 // pred_check
      _
    $region11: #{tpu_custom_call.1} parent=1 // pred_check_branch
      %36 = sbr.rel (0) target = $region13
    $region12: #{tpu_custom_call.1} parent=1 // pred_region
      %37 = dma.done [#allocation5], 128
    $region13: #{tpu_custom_call.1} parent=1 // pred_fallthru
      _
    // Predicated region
    $region14: #{tpu_custom_call.1} parent=1 // pred_check
      _
    $region15: #{tpu_custom_call.1} parent=1 // pred_check_branch
      %39 = sbr.rel (0) target = $region17
    $region16: #{tpu_custom_call.1} parent=1 // pred_region
      %40 = dma.done [#allocation8], 256
    $region17: #{tpu_custom_call.1} parent=1 // pred_fallthru
      _
    %s41 = sld [smem:[#allocation3]]
    %v42 = vld [vmem:[#allocation7] sm:$0xff]
    %v43 = vld [vmem:[#allocation7 + $0x8] sm:$0xff]
    %v44 = vld [vmem:[#allocation4] sm:$0xff]
    %46 = vset.pattern.permute.xlu0 0
    %47 = vperm.xlu0 %46, %v44
    %v48 = vpop.permute.xlu0 %47
    %v50 = vmul.f32 %v48, %v42
    %v51 = vmul.f32 %v48, %v43
    %52 = vset.pattern.permute.xlu0 8
    %53 = vperm.xlu0 %52, %v44
    %v54 = vpop.permute.xlu0 %53
    %v56 = vadd.f32 %v54, %v50
    %v57 = vadd.f32 %v54, %v51
    %v58 = vrot.slane %v42, 7
    %v59 = vrot.slane %v43, 7
    %60 = vset.pattern.permute.xlu0 1
    %61 = vperm.xlu0 %60, %v44
    %v62 = vpop.permute.xlu0 %61
    %v64 = vmul.f32 %v62, %v58
    %v65 = vmul.f32 %v62, %v59
    %v66 = vadd.f32 %v56, %v64
    %v67 = vadd.f32 %v57, %v65
    %v68 = vrot.slane %v42, 6
    %v69 = vrot.slane %v43, 6
    %70 = vset.pattern.permute.xlu0 2
    %71 = vperm.xlu0 %70, %v44
    %v72 = vpop.permute.xlu0 %71
    %v74 = vmul.f32 %v72, %v68
    %v75 = vmul.f32 %v72, %v69
    %v76 = vadd.f32 %v66, %v74
    %v77 = vadd.f32 %v67, %v75
    %v78 = vrot.slane %v42, 5
    %v79 = vrot.slane %v43, 5
    %80 = vset.pattern.permute.xlu0 3
    %81 = vperm.xlu0 %80, %v44
    %v82 = vpop.permute.xlu0 %81
    %v84 = vmul.f32 %v82, %v78
    %v85 = vmul.f32 %v82, %v79
    %v86 = vadd.f32 %v76, %v84
    %v87 = vadd.f32 %v77, %v85
    %v88 = vrot.slane %v42, 3
    %v89 = vrot.slane %v43, 3
    %90 = vset.pattern.permute.xlu0 5
    %91 = vperm.xlu0 %90, %v44
    %v92 = vpop.permute.xlu0 %91
    %v94 = vmul.f32 %v92, %v88
    %v95 = vmul.f32 %v92, %v89
    %v96 = vadd.f32 %v86, %v94
    %v97 = vadd.f32 %v87, %v95
    %v98 = vrot.slane %v42, 2
    %v99 = vrot.slane %v43, 2
    %100 = vset.pattern.permute.xlu0 6
    %101 = vperm.xlu0 %100, %v44
    %v102 = vpop.permute.xlu0 %101
    %v104 = vmul.f32 %v102, %v98
    %v105 = vmul.f32 %v102, %v99
    %v106 = vadd.f32 %v96, %v104
    %v107 = vadd.f32 %v97, %v105
    %v108 = vrot.slane %v42, 1
    %v109 = vrot.slane %v43, 1
    %110 = vset.pattern.permute.xlu0 7
    %111 = vperm.xlu0 %110, %v44
    %v112 = vpop.permute.xlu0 %111
    %v114 = vmul.f32 %v112, %v108
    %v115 = vmul.f32 %v112, %v109
    %v116 = vadd.f32 %v106, %v114
    %v117 = vadd.f32 %v107, %v115
    %118 = vst [vmem:[#allocation9] sm:$0xff] %v116
    %119 = vst [vmem:[#allocation9 + $0x8] sm:$0xff] %v117
    // Predicated region
    $region18: #{tpu_custom_call.1} parent=1 // pred_check
      _
    $region19: #{tpu_custom_call.1} parent=1 // pred_check_branch
      %121 = sbr.rel (0) target = $region21
    $region20: #{tpu_custom_call.1} parent=1 // pred_region
      %s123 = ssub.s32 256, 256
      %124 = vsyncadd [#allocation6], %s123
      %s126 = sshll.u32 [#allocation9], 4
      %s127 = int_to_ptr.vmem [resolvable:$true] %s126
      %129 = dma.vmem_to_hbm [thread:$0]  %s127, 256, %s3, [#allocation6]
    $region21: #{tpu_custom_call.1} parent=1 // pred_fallthru
      _
    // Predicated region
    $region22: #{tpu_custom_call.1} parent=1 // pred_check
      _
    $region23: #{tpu_custom_call.1} parent=1 // pred_check_branch
      %131 = sbr.rel (0) target = $region25
    $region24: #{tpu_custom_call.1} parent=1 // pred_region
      %132 = dma.done [#allocation6], 256
    $region25: #{tpu_custom_call.1} parent=1 // pred_fallthru
      _
    %133 = vsyncpa [#allocation5], 1
    %134 = vsyncpa [#allocation8], 1
    %135 = vsyncpa [#allocation6], 1

</llo_original>
